<compile_context>
chip_gen: v7x
topology: tpu7x:2x2x1
jax: 0.10.0
libtpu: 0.0.40
codegen_flags: <defaults>
</compile_context>

<pallas_src>
import functools

import jax
import jax.numpy as jnp
from jax import lax
from jax.experimental import pallas as pl
from jax.experimental.pallas import tpu as pltpu


CHANNELS_LIST = [4, 8, 16]
N_CONV_PER_LAYER = 2
KERNEL_LIST = [7, 7]          # pooling is MaxPool1d -> [7, 7, 5, 5, 3, 3][:num_layers-1]
L_IN = 107                    # module "depth" for non-'linear' padding
LANE = 128                    # per-batch-element lane width (lane-dense padding of L)
C0_PAD = 8                    # raw input channels (4) zero-padded to sublane-aligned 8
MAX_CHUNK_ROWS = 64           # cap on the im2col contraction per MXU push (spill avoidance)


# ----------------------------------------------------------------------------
# Fused encoder kernel
# ----------------------------------------------------------------------------
def _encoder_kernel(x_ref, w_ref, b_ref, o_ref, *, l_in):
    n_lanes = x_ref.shape[1]                                   # B * LANE
    # Lane index *within each 128-lane batch block* (LANE is a power of two).
    lane = lax.broadcasted_iota(jnp.int32, (1, n_lanes), 1) % LANE

    def conv_same(x, layer, cin, cout, k, stride, length):
        """Conv1d(k, stride=1, padding='same') on the strided lane layout.

        Invariant on x: sample t lives at lane (b*LANE + stride*t) for t < length and
        every other lane inside a batch block is zero -- that zero provides the 'same'
        padding for the tap rolls (pltpu.roll wraps, but wrapped lanes only ever land on
        zero lanes or on lanes the post-conv mask zeroes again).
        """
        pad = (k - 1) // 2
        taps_per_chunk = max(1, MAX_CHUNK_ROWS // cin)
        acc = None
        for k0 in range(0, k, taps_per_chunk):
            k1 = min(k, k0 + taps_per_chunk)
            cols = []
            for kk in range(k0, k1):
                sh = (stride * (pad - kk)) % n_lanes
                cols.append(x if sh == 0 else pltpu.roll(x, sh, axis=1))
            # xcol[(kk-k0)*cin + c, p] = x[c, p - stride*(pad-kk)]
            xcol = jnp.concatenate(cols, axis=0)
            w_chunk = w_ref[layer, :cout, k0 * cin:k1 * cin]
            part = jnp.dot(w_chunk, xcol, preferred_element_type=jnp.float32)
            acc = part if acc is None else acc + part
        y = acc + b_ref[:cout, layer:layer + 1]
        # Re-establish the invariant: only stride-aligned, in-range lanes stay nonzero
        # (the bias broadcast above touched every lane).
        valid = lane < stride * length
        if stride > 1:
            valid = valid & (lane % stride == 0)
        return jnp.where(valid, y, 0.0)

    def pool_relu(x, stride, length, *, mask_out):
        """MaxPool1d(2) (floor mode, drops a trailing odd sample) + ReLU.
        Pooled samples stay at stride-2x lane positions (no compaction matmul)."""
        l_out = length // 2
        m = jnp.maximum(x, pltpu.roll(x, (-stride) % n_lanes, axis=1))
        m = jnp.maximum(m, 0.0)                                # ReLU (Dropout = identity)
        s2 = 2 * stride
        if mask_out:
            valid = (lane < s2 * l_out) & (lane % s2 == 0)
            m = jnp.where(valid, m, 0.0)
        return m, s2, l_out

    c1, c2 = CHANNELS_LIST[1], CHANNELS_LIST[2]

    h = x_ref[...]                                             # (8, B*LANE) lane-dense slab
    stride, length = 1, l_in
    h = conv_same(h, 0, C0_PAD, c1, KERNEL_LIST[0], stride, length)
    h = conv_same(h, 1, c1, c1, KERNEL_LIST[0], stride, length)
    h, stride, length = pool_relu(h, stride, length, mask_out=True)    # 107 -> 53
    h = conv_same(h, 2, c1, c2, KERNEL_LIST[1], stride, length)
    h = conv_same(h, 3, c2, c2, KERNEL_LIST[1], stride, length)
    h, stride, length = pool_relu(h, stride, length, mask_out=False)   # 53 -> 26
    o_ref[...] = h                                             # single full-width store


# ----------------------------------------------------------------------------
# Wrapper: layout plumbing (XLA side) + one pallas_call
# ----------------------------------------------------------------------------
def _im2col_weight(w, cin_pad=None):
    """(Cout, Cin, K) torch conv weight -> (Cout, K*Cin); column (kk*Cin + c) multiplies
    input channel c of the tap-kk shifted input row."""
    cout, cin, k = w.shape
    if cin_pad is not None and cin_pad > cin:
        w = jnp.pad(w, ((0, 0), (0, cin_pad - cin), (0, 0)))
        cin = cin_pad
    return jnp.transpose(w, (0, 2, 1)).reshape(cout, k * cin)


@jax.jit
def encoder_forward_pallas(x, params):
    """x: (B, 4, 107) f32; params: [[(w, b), (w, b)], [(w, b), (w, b)]] in torch layout."""
    B, c_in, l_in = x.shape
    c_last = CHANNELS_LIST[-1]
    n_blocks = len(CHANNELS_LIST) - 1

    # Static layout-safety checks: a tap roll must never reach a *valid* lane of the
    # neighbouring batch block (review correctness concern #2).
    length, stride, l_out = l_in, 1, l_in
    for i in range(n_blocks):
        pad = (KERNEL_LIST[i] - 1) // 2
        assert stride * (length - 1 + pad) < LANE, "strided lane layout overflows 128 lanes"
        length //= 2
        stride *= 2
        l_out //= 2
    final_stride = stride                                       # 4

    # --- wrapper-side packing (pure layout, fuses into XLA; no in-kernel copies) ------
    # Input -> one lane-dense slab: xs[c, b*LANE + t] = x[b, c, t], zero elsewhere.
    xp = jnp.pad(x, ((0, 0), (0, C0_PAD - c_in), (0, LANE - l_in)))     # (B, 8, 128)
    xs = jnp.transpose(xp, (1, 0, 2)).reshape(C0_PAD, B * LANE)

    # All conv weights -> one (4, 16, 112) im2col slab; all biases -> one (16, 4) slab.
    (w0, b0), (w1, b1) = params[0]
    (w2, b2), (w3, b3) = params[1]
    mats = [_im2col_weight(w0, cin_pad=C0_PAD), _im2col_weight(w1),
            _im2col_weight(w2), _im2col_weight(w3)]
    kcin_max = max(m.shape[1] for m in mats)
    w_slab = jnp.stack([jnp.pad(m, ((0, c_last - m.shape[0]),
                                    (0, kcin_max - m.shape[1]))) for m in mats])
    b_slab = jnp.stack([jnp.pad(b, (0, c_last - b.shape[0]))
                        for b in (b0, b1, b2, b3)], axis=1)

    slab = pl.pallas_call(
        functools.partial(_encoder_kernel, l_in=l_in),
        out_shape=jax.ShapeDtypeStruct((c_last, B * LANE), jnp.float32),
        in_specs=[pl.BlockSpec(memory_space=pltpu.MemorySpace.VMEM)] * 3,
        out_specs=pl.BlockSpec(memory_space=pltpu.MemorySpace.VMEM),
    )(xs, w_slab, b_slab)

    # Final samples live at lanes b*LANE + final_stride*t, t < l_out.
    out = slab.reshape(c_last, B, LANE).transpose(1, 0, 2)
    return out[:, :, :final_stride * l_out:final_stride]


# ----------------------------------------------------------------------------
# Parameter init (torch Conv1d default ranges) and a pure-JAX reference
# ----------------------------------------------------------------------------
def init_params(key):
    params = []
    for i in range(len(CHANNELS_LIST) - 1):
        ker = KERNEL_LIST[i]
        block = []
        for j in range(N_CONV_PER_LAYER):
            in_ch = CHANNELS_LIST[i] if j == 0 else CHANNELS_LIST[i + 1]
            out_ch = CHANNELS_LIST[i + 1]
            key, kw, kb = jax.random.split(key, 3)
            bound = 1.0 / jnp.sqrt(in_ch * ker)
            w = jax.random.uniform(kw, (out_ch, in_ch, ker), jnp.float32, -bound, bound)
            b = jax.random.uniform(kb, (out_ch,), jnp.float32, -bound, bound)
            block.append((w, b))
        params.append(block)
    return params


def encoder_forward_ref(x, params):
    for block in params:
        for (w, b) in block:
            pad = (w.shape[-1] - 1) // 2
            x = lax.conv_general_dilated(
                x, w, window_strides=(1,), padding=[(pad, pad)],
                dimension_numbers=("NCH", "OIH", "NCH")) + b[None, :, None]
        x = lax.reduce_window(x, -jnp.inf, lax.max, (1, 1, 2), (1, 1, 2), "VALID")
        x = jnp.maximum(x, 0.0)
    return x


if __name__ == "__main__":
    key = jax.random.PRNGKey(0)
    key, kx = jax.random.split(key)

    B = 2
    x = jax.random.normal(kx, (B, CHANNELS_LIST[0], L_IN), jnp.float32)
    params = init_params(key)

    y = encoder_forward_pallas(x, params)
    y = jax.block_until_ready(y)

    y_ref = encoder_forward_ref(x, params)
    assert y.shape == (B, CHANNELS_LIST[-1], 26), y.shape
    max_err = float(jnp.max(jnp.abs(y - y_ref)))
    assert jnp.allclose(y, y_ref, atol=5e-4, rtol=5e-4), max_err

    print("KERNEL_OK")
</pallas_src>

<mosaic_0001>
module attributes {stable_mosaic.version = 11 : i64} {
  func.func @_encoder_kernel(%arg0: memref<8x256xf32, #tpu.memory_space<vmem>>, %arg1: memref<4x16x112xf32, #tpu.memory_space<vmem>>, %arg2: memref<16x4xf32, #tpu.memory_space<vmem>>, %arg3: memref<16x256xf32, #tpu.memory_space<vmem>>) attributes {dimension_semantics = [], scalar_prefetch = 0 : i64, scratch_operands = 0 : i64, tpu.core_type = #tpu.core_type<tc>} {
    %0 = tpu.iota {dimensions = array<i32: 1>} : vector<1x256xi32>
    %c128_i32 = arith.constant 128 : i32
    %c0_i32 = arith.constant 0 : i32
    %1 = arith.cmpi eq, %c128_i32, %c0_i32 : i32
    %c1_i32 = arith.constant 1 : i32
    %2 = arith.select %1, %c1_i32, %c128_i32 : i32
    %3 = vector.broadcast %2 : i32 to vector<1x256xi32>
    %4 = arith.remsi %0, %3 : vector<1x256xi32>
    %c0_i32_0 = arith.constant 0 : i32
    %5 = vector.broadcast %c0_i32_0 : i32 to vector<1x256xi32>
    %6 = arith.cmpi ne, %4, %5 : vector<1x256xi32>
    %c0_i32_1 = arith.constant 0 : i32
    %7 = vector.broadcast %c0_i32_1 : i32 to vector<1x256xi32>
    %8 = arith.cmpi slt, %4, %7 : vector<1x256xi32>
    %c0_i32_2 = arith.constant 0 : i32
    %9 = arith.cmpi slt, %2, %c0_i32_2 : i32
    %10 = vector.broadcast %9 : i1 to vector<1x256xi1>
    %11 = vector.broadcast %10 : vector<1x256xi1> to vector<1x256xi1>
    %12 = arith.xori %8, %11 : vector<1x256xi1>
    %13 = arith.andi %12, %6 : vector<1x256xi1>
    %14 = vector.broadcast %2 : i32 to vector<1x256xi32>
    %15 = arith.addi %4, %14 : vector<1x256xi32>
    %16 = arith.select %13, %15, %4 : vector<1x256xi1>, vector<1x256xi32>
    %c0 = arith.constant 0 : index
    %c0_3 = arith.constant 0 : index
    %17 = vector.load %arg0[%c0, %c0_3] : memref<8x256xf32, #tpu.memory_space<vmem>>, vector<8x256xf32>
    %c3_i32 = arith.constant 3 : i32
    %18 = tpu.dynamic_rotate %17 by %c3_i32 dim 1 : vector<8x256xf32>, i32 -> vector<8x256xf32>
    %c2_i32 = arith.constant 2 : i32
    %19 = tpu.dynamic_rotate %17 by %c2_i32 dim 1 : vector<8x256xf32>, i32 -> vector<8x256xf32>
    %c1_i32_4 = arith.constant 1 : i32
    %20 = tpu.dynamic_rotate %17 by %c1_i32_4 dim 1 : vector<8x256xf32>, i32 -> vector<8x256xf32>
    %c255_i32 = arith.constant 255 : i32
    %21 = tpu.dynamic_rotate %17 by %c255_i32 dim 1 : vector<8x256xf32>, i32 -> vector<8x256xf32>
    %c254_i32 = arith.constant 254 : i32
    %22 = tpu.dynamic_rotate %17 by %c254_i32 dim 1 : vector<8x256xf32>, i32 -> vector<8x256xf32>
    %c253_i32 = arith.constant 253 : i32
    %23 = tpu.dynamic_rotate %17 by %c253_i32 dim 1 : vector<8x256xf32>, i32 -> vector<8x256xf32>
    %24 = tpu.concatenate %18, %19, %20, %17, %21, %22, %23 in 0 : vector<8x256xf32>, vector<8x256xf32>, vector<8x256xf32>, vector<8x256xf32>, vector<8x256xf32>, vector<8x256xf32>, vector<8x256xf32> -> vector<56x256xf32>
    %c0_5 = arith.constant 0 : index
    %c0_6 = arith.constant 0 : index
    %c0_7 = arith.constant 0 : index
    %25 = vector.load %arg1[%c0_5, %c0_6, %c0_7] : memref<4x16x112xf32, #tpu.memory_space<vmem>>, vector<1x8x56xf32>
    %26 = vector.shape_cast %25 : vector<1x8x56xf32> to vector<8x56xf32>
    %cst = arith.constant dense<0.000000e+00> : vector<8x256xf32>
    %27 = tpu.matmul %26, %24, %cst {dimension_numbers = #tpu.dot_dimension_numbers<[1], [0], [0], [1], [0, 0, 1, 1], [], []>} : vector<8x56xf32>, vector<56x256xf32>, vector<8x256xf32> -> vector<8x256xf32>
    %c0_8 = arith.constant 0 : index
    %c0_9 = arith.constant 0 : index
    %28 = vector.load %arg2[%c0_8, %c0_9] : memref<16x4xf32, #tpu.memory_space<vmem>>, vector<8x1xf32>
    %29 = vector.broadcast %28 : vector<8x1xf32> to vector<8x256xf32>
    %30 = arith.addf %27, %29 : vector<8x256xf32>
    %c107_i32 = arith.constant 107 : i32
    %31 = vector.broadcast %c107_i32 : i32 to vector<1x256xi32>
    %32 = arith.cmpi slt, %16, %31 : vector<1x256xi32>
    %cst_10 = arith.constant 0.000000e+00 : f32
    %33 = vector.shape_cast %32 : vector<1x256xi1> to vector<1x256xi1>
    %34 = vector.broadcast %33 : vector<1x256xi1> to vector<8x256xi1>
    %35 = vector.broadcast %cst_10 : f32 to vector<8x256xf32>
    %36 = arith.select %34, %30, %35 : vector<8x256xi1>, vector<8x256xf32>
    %c3_i32_11 = arith.constant 3 : i32
    %37 = tpu.dynamic_rotate %36 by %c3_i32_11 dim 1 : vector<8x256xf32>, i32 -> vector<8x256xf32>
    %c2_i32_12 = arith.constant 2 : i32
    %38 = tpu.dynamic_rotate %36 by %c2_i32_12 dim 1 : vector<8x256xf32>, i32 -> vector<8x256xf32>
    %c1_i32_13 = arith.constant 1 : i32
    %39 = tpu.dynamic_rotate %36 by %c1_i32_13 dim 1 : vector<8x256xf32>, i32 -> vector<8x256xf32>
    %c255_i32_14 = arith.constant 255 : i32
    %40 = tpu.dynamic_rotate %36 by %c255_i32_14 dim 1 : vector<8x256xf32>, i32 -> vector<8x256xf32>
    %c254_i32_15 = arith.constant 254 : i32
    %41 = tpu.dynamic_rotate %36 by %c254_i32_15 dim 1 : vector<8x256xf32>, i32 -> vector<8x256xf32>
    %c253_i32_16 = arith.constant 253 : i32
    %42 = tpu.dynamic_rotate %36 by %c253_i32_16 dim 1 : vector<8x256xf32>, i32 -> vector<8x256xf32>
    %43 = tpu.concatenate %37, %38, %39, %36, %40, %41, %42 in 0 : vector<8x256xf32>, vector<8x256xf32>, vector<8x256xf32>, vector<8x256xf32>, vector<8x256xf32>, vector<8x256xf32>, vector<8x256xf32> -> vector<56x256xf32>
    %c1 = arith.constant 1 : index
    %c0_17 = arith.constant 0 : index
    %c0_18 = arith.constant 0 : index
    %44 = vector.load %arg1[%c1, %c0_17, %c0_18] : memref<4x16x112xf32, #tpu.memory_space<vmem>>, vector<1x8x56xf32>
    %45 = vector.shape_cast %44 : vector<1x8x56xf32> to vector<8x56xf32>
    %cst_19 = arith.constant dense<0.000000e+00> : vector<8x256xf32>
    %46 = tpu.matmul %45, %43, %cst_19 {dimension_numbers = #tpu.dot_dimension_numbers<[1], [0], [0], [1], [0, 0, 1, 1], [], []>} : vector<8x56xf32>, vector<56x256xf32>, vector<8x256xf32> -> vector<8x256xf32>
    %c0_20 = arith.constant 0 : index
    %c1_21 = arith.constant 1 : index
    %47 = vector.load %arg2[%c0_20, %c1_21] : memref<16x4xf32, #tpu.memory_space<vmem>>, vector<8x1xf32>
    %48 = vector.broadcast %47 : vector<8x1xf32> to vector<8x256xf32>
    %49 = arith.addf %46, %48 : vector<8x256xf32>
    %c107_i32_22 = arith.constant 107 : i32
    %50 = vector.broadcast %c107_i32_22 : i32 to vector<1x256xi32>
    %51 = arith.cmpi slt, %16, %50 : vector<1x256xi32>
    %cst_23 = arith.constant 0.000000e+00 : f32
    %52 = vector.shape_cast %51 : vector<1x256xi1> to vector<1x256xi1>
    %53 = vector.broadcast %52 : vector<1x256xi1> to vector<8x256xi1>
    %54 = vector.broadcast %cst_23 : f32 to vector<8x256xf32>
    %55 = arith.select %53, %49, %54 : vector<8x256xi1>, vector<8x256xf32>
    %c255_i32_24 = arith.constant 255 : i32
    %56 = tpu.dynamic_rotate %55 by %c255_i32_24 dim 1 : vector<8x256xf32>, i32 -> vector<8x256xf32>
    %57 = arith.maximumf %55, %56 : vector<8x256xf32>
    %cst_25 = arith.constant 0.000000e+00 : f32
    %58 = vector.broadcast %cst_25 : f32 to vector<8x256xf32>
    %59 = arith.maximumf %57, %58 : vector<8x256xf32>
    %c106_i32 = arith.constant 106 : i32
    %60 = vector.broadcast %c106_i32 : i32 to vector<1x256xi32>
    %61 = arith.cmpi slt, %16, %60 : vector<1x256xi32>
    %c2_i32_26 = arith.constant 2 : i32
    %c0_i32_27 = arith.constant 0 : i32
    %62 = arith.cmpi eq, %c2_i32_26, %c0_i32_27 : i32
    %c1_i32_28 = arith.constant 1 : i32
    %63 = arith.select %62, %c1_i32_28, %c2_i32_26 : i32
    %64 = vector.broadcast %63 : i32 to vector<1x256xi32>
    %65 = arith.remsi %16, %64 : vector<1x256xi32>
    %c0_i32_29 = arith.constant 0 : i32
    %66 = vector.broadcast %c0_i32_29 : i32 to vector<1x256xi32>
    %67 = arith.cmpi ne, %65, %66 : vector<1x256xi32>
    %c0_i32_30 = arith.constant 0 : i32
    %68 = vector.broadcast %c0_i32_30 : i32 to vector<1x256xi32>
    %69 = arith.cmpi slt, %65, %68 : vector<1x256xi32>
    %c0_i32_31 = arith.constant 0 : i32
    %70 = arith.cmpi slt, %63, %c0_i32_31 : i32
    %71 = vector.broadcast %70 : i1 to vector<1x256xi1>
    %72 = vector.broadcast %71 : vector<1x256xi1> to vector<1x256xi1>
    %73 = arith.xori %69, %72 : vector<1x256xi1>
    %74 = arith.andi %73, %67 : vector<1x256xi1>
    %75 = vector.broadcast %63 : i32 to vector<1x256xi32>
    %76 = arith.addi %65, %75 : vector<1x256xi32>
    %77 = arith.select %74, %76, %65 : vector<1x256xi1>, vector<1x256xi32>
    %c0_i32_32 = arith.constant 0 : i32
    %78 = vector.broadcast %c0_i32_32 : i32 to vector<1x256xi32>
    %79 = arith.cmpi eq, %77, %78 : vector<1x256xi32>
    %80 = arith.andi %61, %79 : vector<1x256xi1>
    %cst_33 = arith.constant 0.000000e+00 : f32
    %81 = vector.shape_cast %80 : vector<1x256xi1> to vector<1x256xi1>
    %82 = vector.broadcast %81 : vector<1x256xi1> to vector<8x256xi1>
    %83 = vector.broadcast %cst_33 : f32 to vector<8x256xf32>
    %84 = arith.select %82, %59, %83 : vector<8x256xi1>, vector<8x256xf32>
    %c6_i32 = arith.constant 6 : i32
    %85 = tpu.dynamic_rotate %84 by %c6_i32 dim 1 : vector<8x256xf32>, i32 -> vector<8x256xf32>
    %c4_i32 = arith.constant 4 : i32
    %86 = tpu.dynamic_rotate %84 by %c4_i32 dim 1 : vector<8x256xf32>, i32 -> vector<8x256xf32>
    %c2_i32_34 = arith.constant 2 : i32
    %87 = tpu.dynamic_rotate %84 by %c2_i32_34 dim 1 : vector<8x256xf32>, i32 -> vector<8x256xf32>
    %c254_i32_35 = arith.constant 254 : i32
    %88 = tpu.dynamic_rotate %84 by %c254_i32_35 dim 1 : vector<8x256xf32>, i32 -> vector<8x256xf32>
    %c252_i32 = arith.constant 252 : i32
    %89 = tpu.dynamic_rotate %84 by %c252_i32 dim 1 : vector<8x256xf32>, i32 -> vector<8x256xf32>
    %c250_i32 = arith.constant 250 : i32
    %90 = tpu.dynamic_rotate %84 by %c250_i32 dim 1 : vector<8x256xf32>, i32 -> vector<8x256xf32>
    %91 = tpu.concatenate %85, %86, %87, %84, %88, %89, %90 in 0 : vector<8x256xf32>, vector<8x256xf32>, vector<8x256xf32>, vector<8x256xf32>, vector<8x256xf32>, vector<8x256xf32>, vector<8x256xf32> -> vector<56x256xf32>
    %c2 = arith.constant 2 : index
    %c0_36 = arith.constant 0 : index
    %c0_37 = arith.constant 0 : index
    %92 = vector.load %arg1[%c2, %c0_36, %c0_37] : memref<4x16x112xf32, #tpu.memory_space<vmem>>, vector<1x16x56xf32>
    %93 = vector.shape_cast %92 : vector<1x16x56xf32> to vector<16x56xf32>
    %cst_38 = arith.constant dense<0.000000e+00> : vector<16x256xf32>
    %94 = tpu.matmul %93, %91, %cst_38 {dimension_numbers = #tpu.dot_dimension_numbers<[1], [0], [0], [1], [0, 0, 1, 1], [], []>} : vector<16x56xf32>, vector<56x256xf32>, vector<16x256xf32> -> vector<16x256xf32>
    %c0_39 = arith.constant 0 : index
    %c2_40 = arith.constant 2 : index
    %95 = vector.load %arg2[%c0_39, %c2_40] : memref<16x4xf32, #tpu.memory_space<vmem>>, vector<16x1xf32>
    %96 = vector.broadcast %95 : vector<16x1xf32> to vector<16x256xf32>
    %97 = arith.addf %94, %96 : vector<16x256xf32>
    %c106_i32_41 = arith.constant 106 : i32
    %98 = vector.broadcast %c106_i32_41 : i32 to vector<1x256xi32>
    %99 = arith.cmpi slt, %16, %98 : vector<1x256xi32>
    %c2_i32_42 = arith.constant 2 : i32
    %c0_i32_43 = arith.constant 0 : i32
    %100 = arith.cmpi eq, %c2_i32_42, %c0_i32_43 : i32
    %c1_i32_44 = arith.constant 1 : i32
    %101 = arith.select %100, %c1_i32_44, %c2_i32_42 : i32
    %102 = vector.broadcast %101 : i32 to vector<1x256xi32>
    %103 = arith.remsi %16, %102 : vector<1x256xi32>
    %c0_i32_45 = arith.constant 0 : i32
    %104 = vector.broadcast %c0_i32_45 : i32 to vector<1x256xi32>
    %105 = arith.cmpi ne, %103, %104 : vector<1x256xi32>
    %c0_i32_46 = arith.constant 0 : i32
    %106 = vector.broadcast %c0_i32_46 : i32 to vector<1x256xi32>
    %107 = arith.cmpi slt, %103, %106 : vector<1x256xi32>
    %c0_i32_47 = arith.constant 0 : i32
    %108 = arith.cmpi slt, %101, %c0_i32_47 : i32
    %109 = vector.broadcast %108 : i1 to vector<1x256xi1>
    %110 = vector.broadcast %109 : vector<1x256xi1> to vector<1x256xi1>
    %111 = arith.xori %107, %110 : vector<1x256xi1>
    %112 = arith.andi %111, %105 : vector<1x256xi1>
    %113 = vector.broadcast %101 : i32 to vector<1x256xi32>
    %114 = arith.addi %103, %113 : vector<1x256xi32>
    %115 = arith.select %112, %114, %103 : vector<1x256xi1>, vector<1x256xi32>
    %c0_i32_48 = arith.constant 0 : i32
    %116 = vector.broadcast %c0_i32_48 : i32 to vector<1x256xi32>
    %117 = arith.cmpi eq, %115, %116 : vector<1x256xi32>
    %118 = arith.andi %99, %117 : vector<1x256xi1>
    %cst_49 = arith.constant 0.000000e+00 : f32
    %119 = vector.shape_cast %118 : vector<1x256xi1> to vector<1x256xi1>
    %120 = vector.broadcast %119 : vector<1x256xi1> to vector<16x256xi1>
    %121 = vector.broadcast %cst_49 : f32 to vector<16x256xf32>
    %122 = arith.select %120, %97, %121 : vector<16x256xi1>, vector<16x256xf32>
    %c6_i32_50 = arith.constant 6 : i32
    %123 = tpu.dynamic_rotate %122 by %c6_i32_50 dim 1 : vector<16x256xf32>, i32 -> vector<16x256xf32>
    %c4_i32_51 = arith.constant 4 : i32
    %124 = tpu.dynamic_rotate %122 by %c4_i32_51 dim 1 : vector<16x256xf32>, i32 -> vector<16x256xf32>
    %c2_i32_52 = arith.constant 2 : i32
    %125 = tpu.dynamic_rotate %122 by %c2_i32_52 dim 1 : vector<16x256xf32>, i32 -> vector<16x256xf32>
    %126 = tpu.concatenate %123, %124, %125, %122 in 0 : vector<16x256xf32>, vector<16x256xf32>, vector<16x256xf32>, vector<16x256xf32> -> vector<64x256xf32>
    %c3 = arith.constant 3 : index
    %c0_53 = arith.constant 0 : index
    %c0_54 = arith.constant 0 : index
    %127 = vector.load %arg1[%c3, %c0_53, %c0_54] : memref<4x16x112xf32, #tpu.memory_space<vmem>>, vector<1x16x64xf32>
    %128 = vector.shape_cast %127 : vector<1x16x64xf32> to vector<16x64xf32>
    %cst_55 = arith.constant dense<0.000000e+00> : vector<16x256xf32>
    %129 = tpu.matmul %128, %126, %cst_55 {dimension_numbers = #tpu.dot_dimension_numbers<[1], [0], [0], [1], [0, 0, 1, 1], [], []>} : vector<16x64xf32>, vector<64x256xf32>, vector<16x256xf32> -> vector<16x256xf32>
    %c254_i32_56 = arith.constant 254 : i32
    %130 = tpu.dynamic_rotate %122 by %c254_i32_56 dim 1 : vector<16x256xf32>, i32 -> vector<16x256xf32>
    %c252_i32_57 = arith.constant 252 : i32
    %131 = tpu.dynamic_rotate %122 by %c252_i32_57 dim 1 : vector<16x256xf32>, i32 -> vector<16x256xf32>
    %c250_i32_58 = arith.constant 250 : i32
    %132 = tpu.dynamic_rotate %122 by %c250_i32_58 dim 1 : vector<16x256xf32>, i32 -> vector<16x256xf32>
    %133 = tpu.concatenate %130, %131, %132 in 0 : vector<16x256xf32>, vector<16x256xf32>, vector<16x256xf32> -> vector<48x256xf32>
    %c3_59 = arith.constant 3 : index
    %c0_60 = arith.constant 0 : index
    %c64 = arith.constant 64 : index
    %134 = vector.load %arg1[%c3_59, %c0_60, %c64] : memref<4x16x112xf32, #tpu.memory_space<vmem>>, vector<1x16x48xf32>
    %135 = vector.shape_cast %134 : vector<1x16x48xf32> to vector<16x48xf32>
    %cst_61 = arith.constant dense<0.000000e+00> : vector<16x256xf32>
    %136 = tpu.matmul %135, %133, %cst_61 {dimension_numbers = #tpu.dot_dimension_numbers<[1], [0], [0], [1], [0, 0, 1, 1], [], []>} : vector<16x48xf32>, vector<48x256xf32>, vector<16x256xf32> -> vector<16x256xf32>
    %137 = arith.addf %129, %136 : vector<16x256xf32>
    %c0_62 = arith.constant 0 : index
    %c3_63 = arith.constant 3 : index
    %138 = vector.load %arg2[%c0_62, %c3_63] : memref<16x4xf32, #tpu.memory_space<vmem>>, vector<16x1xf32>
    %139 = vector.broadcast %138 : vector<16x1xf32> to vector<16x256xf32>
    %140 = arith.addf %137, %139 : vector<16x256xf32>
    %c106_i32_64 = arith.constant 106 : i32
    %141 = vector.broadcast %c106_i32_64 : i32 to vector<1x256xi32>
    %142 = arith.cmpi slt, %16, %141 : vector<1x256xi32>
    %c2_i32_65 = arith.constant 2 : i32
    %c0_i32_66 = arith.constant 0 : i32
    %143 = arith.cmpi eq, %c2_i32_65, %c0_i32_66 : i32
    %c1_i32_67 = arith.constant 1 : i32
    %144 = arith.select %143, %c1_i32_67, %c2_i32_65 : i32
    %145 = vector.broadcast %144 : i32 to vector<1x256xi32>
    %146 = arith.remsi %16, %145 : vector<1x256xi32>
    %c0_i32_68 = arith.constant 0 : i32
    %147 = vector.broadcast %c0_i32_68 : i32 to vector<1x256xi32>
    %148 = arith.cmpi ne, %146, %147 : vector<1x256xi32>
    %c0_i32_69 = arith.constant 0 : i32
    %149 = vector.broadcast %c0_i32_69 : i32 to vector<1x256xi32>
    %150 = arith.cmpi slt, %146, %149 : vector<1x256xi32>
    %c0_i32_70 = arith.constant 0 : i32
    %151 = arith.cmpi slt, %144, %c0_i32_70 : i32
    %152 = vector.broadcast %151 : i1 to vector<1x256xi1>
    %153 = vector.broadcast %152 : vector<1x256xi1> to vector<1x256xi1>
    %154 = arith.xori %150, %153 : vector<1x256xi1>
    %155 = arith.andi %154, %148 : vector<1x256xi1>
    %156 = vector.broadcast %144 : i32 to vector<1x256xi32>
    %157 = arith.addi %146, %156 : vector<1x256xi32>
    %158 = arith.select %155, %157, %146 : vector<1x256xi1>, vector<1x256xi32>
    %c0_i32_71 = arith.constant 0 : i32
    %159 = vector.broadcast %c0_i32_71 : i32 to vector<1x256xi32>
    %160 = arith.cmpi eq, %158, %159 : vector<1x256xi32>
    %161 = arith.andi %142, %160 : vector<1x256xi1>
    %cst_72 = arith.constant 0.000000e+00 : f32
    %162 = vector.shape_cast %161 : vector<1x256xi1> to vector<1x256xi1>
    %163 = vector.broadcast %162 : vector<1x256xi1> to vector<16x256xi1>
    %164 = vector.broadcast %cst_72 : f32 to vector<16x256xf32>
    %165 = arith.select %163, %140, %164 : vector<16x256xi1>, vector<16x256xf32>
    %c254_i32_73 = arith.constant 254 : i32
    %166 = tpu.dynamic_rotate %165 by %c254_i32_73 dim 1 : vector<16x256xf32>, i32 -> vector<16x256xf32>
    %167 = arith.maximumf %165, %166 : vector<16x256xf32>
    %cst_74 = arith.constant 0.000000e+00 : f32
    %168 = vector.broadcast %cst_74 : f32 to vector<16x256xf32>
    %169 = arith.maximumf %167, %168 : vector<16x256xf32>
    %c0_75 = arith.constant 0 : index
    %c0_76 = arith.constant 0 : index
    %170 = vector.load %arg3[%c0_75, %c0_76] : memref<16x256xf32, #tpu.memory_space<vmem>>, vector<16x256xf32>
    tpu.vector_store %arg3[%c0_75, %c0_76], %169 {strides = array<i32>} : memref<16x256xf32, #tpu.memory_space<vmem>>, vector<16x256xf32>,
    return
  }
}

</mosaic_0001>

<llo_original>
// kernel: encoder_forward_pallas.1
$region0: #{encoder_forward_pallas.1}
  #allocation0 [shape = 'u32[]', space=smem, size = 0x4, offset = 0x4, fixed_abs, tag = 'smem constant byte address 0x4 - core index']
  #allocation1 [shape = 'u32[144,128]{1,0:T(1,128)}', space=vmem, size = 0x12000, scoped, tag = 'internal scratch']
  %s0 = inlined_call_operand.vmem [shape: f32[8,256], index: 0, kind: input, shape index: {}]
  %s1 = inlined_call_operand.vmem [shape: f32[4,16,112], index: 1, kind: input, shape index: {}]
  %s2 = inlined_call_operand.vmem [shape: f32[16,4], index: 2, kind: input, shape index: {}]
  %s3 = inlined_call_operand.vmem [shape: f32[16,256], index: 3, kind: output, shape index: {}]
  %s4 = sld [smem:[#allocation0]]
  $region22: #{encoder_forward_pallas.1} parent=0
    _
  %s6 = ssub.s32 1, %s4
  %s7 = scalar_select 0, %s6, %s4
  // Predicated region
  $region2: #{encoder_forward_pallas.1} parent=0 // pred_check
    _
  $region3: #{encoder_forward_pallas.1} parent=0 // pred_check_branch
    %9 = sbr.rel (0) target = $region5
  $region4: #{encoder_forward_pallas.1} parent=0 // pred_region
    _
  $region5: #{encoder_forward_pallas.1} parent=0 // pred_fallthru
    _
  // Predicated region
  $region6: #{encoder_forward_pallas.1} parent=0 // pred_check
    _
  $region7: #{encoder_forward_pallas.1} parent=0 // pred_check_branch
    %11 = sbr.rel (0) target = $region9
  $region8: #{encoder_forward_pallas.1} parent=0 // pred_region
    _
  $region9: #{encoder_forward_pallas.1} parent=0 // pred_fallthru
    _
  // Predicated region
  $region10: #{encoder_forward_pallas.1} parent=0 // pred_check
    _
  $region11: #{encoder_forward_pallas.1} parent=0 // pred_check_branch
    %13 = sbr.rel (0) target = $region13
  $region12: #{encoder_forward_pallas.1} parent=0 // pred_region
    _
  $region13: #{encoder_forward_pallas.1} parent=0 // pred_fallthru
    _
  %v14 = vlaneseq
  %v15 = vand.u32 %v14, 127
  %v16 = vadd.s32 %v15, 128
  %vm17 = vcmp.lt.s32.totalorder %v15, 0
  %v18 = vsub.s32 0, %v15
  %v19 = vsel %vm17, %v18, %v15
  %v20 = vshrl.u32 %v19, 7
  %v21 = vand.u32 %v19, 127
  %v22 = vsub.s32 0, %v21
  %v23 = vsel %vm17, %v22, %v21
  %vm24 = vcmp.lt.s32.totalorder %v16, 0
  %v25 = vsub.s32 0, %v16
  %v26 = vsel %vm24, %v25, %v16
  %v27 = vshrl.u32 %v26, 7
  %v28 = vand.u32 %v26, 127
  %v29 = vsub.s32 0, %v28
  %v30 = vsel %vm24, %v29, %v28
  %vm31 = vcmp.ne.s32.totalorder %v23, 0
  %vm32 = vcmp.ne.s32.totalorder %v30, 0
  %vm33 = vcmp.lt.s32.totalorder %v23, 0
  %vm34 = vcmp.lt.s32.totalorder %v30, 0
  %vm35 = vmand %vm33, %vm31
  %vm36 = vmand %vm34, %vm32
  %v37 = vadd.s32 %v23, 128
  %v38 = vadd.s32 %v30, 128
  %v39 = vsel %vm35, %v37, %v23
  %v40 = vsel %vm36, %v38, %v30
  %v41 = vld [vmem:[%s0] sm:$0xff]
  %v42 = vld [vmem:[%s0 + $0x8] sm:$0xff]
  %43 = vrot.lane.b32.xlu0 %v41, 3
  %v44 = vpop.permute.xlu0 %43
  %45 = vrot.lane.b32.xlu0 %v42, 3
  %v46 = vpop.permute.xlu0 %45
  %vm47 = vcmp.lt.s32.totalorder %v15, 3
  %v48 = vsel %vm47, %v44, %v46
  %v49 = vsel %vm47, %v46, %v44
  %50 = vrot.lane.b32.xlu0 %v41, 2
  %v51 = vpop.permute.xlu0 %50
  %52 = vrot.lane.b32.xlu0 %v42, 2
  %v53 = vpop.permute.xlu0 %52
  %vm54 = vcmp.lt.s32.totalorder %v15, 2
  %v55 = vsel %vm54, %v51, %v53
  %v56 = vsel %vm54, %v53, %v51
  %57 = vrot.lane.b32.xlu0 %v41, 1
  %v58 = vpop.permute.xlu0 %57
  %59 = vrot.lane.b32.xlu0 %v42, 1
  %v60 = vpop.permute.xlu0 %59
  %vm61 = vcmp.lt.s32.totalorder %v15, 1
  %v62 = vsel %vm61, %v58, %v60
  %v63 = vsel %vm61, %v60, %v58
  %64 = vrot.lane.b32.xlu0 %v41, 127
  %v65 = vpop.permute.xlu0 %64
  %66 = vrot.lane.b32.xlu0 %v42, 127
  %v67 = vpop.permute.xlu0 %66
  %vm68 = vcmp.lt.s32.totalorder %v15, 127
  %v69 = vsel %vm68, %v65, %v67
  %v70 = vsel %vm68, %v67, %v65
  %71 = vrot.lane.b32.xlu0 %v41, 126
  %v72 = vpop.permute.xlu0 %71
  %73 = vrot.lane.b32.xlu0 %v42, 126
  %v74 = vpop.permute.xlu0 %73
  %vm75 = vcmp.lt.s32.totalorder %v15, 126
  %v76 = vsel %vm75, %v72, %v74
  %v77 = vsel %vm75, %v74, %v72
  %78 = vrot.lane.b32.xlu0 %v41, 125
  %v79 = vpop.permute.xlu0 %78
  %80 = vrot.lane.b32.xlu0 %v42, 125
  %v81 = vpop.permute.xlu0 %80
  %vm82 = vcmp.lt.s32.totalorder %v15, 125
  %v83 = vsel %vm82, %v79, %v81
  %v84 = vsel %vm82, %v81, %v79
  %v85 = vld [vmem:[%s1] sm:$0xff]
  %v86 = vld [vmem:[%s2] sm:$0xff]
  %88 = vset.pattern.permute.xlu0 0
  %89 = vperm.xlu0 %88, %v86
  %v90 = vpop.permute.xlu0 %89
  %vm92 = vcmask 457728
  %v94 = vsel %vm92, %v85, 0
  %96 = vmatprep.subr.mxu0 %v48
  %97 = vmatpush1.msra.mxu0 %v49
  %98 = vmatprep.subr.mxu0 %v55
  %99 = vmatpush1.msra.mxu0 %v56
  %100 = vmatprep.subr.mxu0 %v62
  %101 = vmatpush1.msra.mxu0 %v63
  %102 = vmatprep.subr.mxu0 %v42
  %103 = vmatpush1.msra.mxu0 %v41
  %104 = vmatprep.subr.mxu0 %v70
  %105 = vmatpush1.msra.mxu0 %v69
  %106 = vmatprep.subr.mxu0 %v77
  %107 = vmatpush1.msra.mxu0 %v76
  %108 = vmatprep.subr.mxu0 %v84
  %109 = vmatpush1.msra.mxu0 %v83
  %110 = vmatprep.subr.mxu0 0.0
  %111 = vmatpush1.msra.mxu0 0.0
  %112 = vmatprep.subr.mxu0 0.0
  %113 = vmatpush1.msra.mxu0 0.0
  %114 = vmatprep.subr.mxu0 0.0
  %115 = vmatpush1.msra.mxu0 0.0
  %116 = vmatprep.subr.mxu0 0.0
  %117 = vmatpush1.msra.mxu0 0.0
  %118 = vmatprep.subr.mxu0 0.0
  %119 = vmatpush1.msra.mxu0 0.0
  %120 = vmatprep.subr.mxu0 0.0
  %121 = vmatpush1.msra.mxu0 0.0
  %122 = vmatprep.subr.mxu0 0.0
  %123 = vmatpush1.msra.mxu0 0.0
  %124 = vmatprep.subr.mxu0 0.0
  %125 = vmatpush1.msra.mxu0 0.0
  %126 = vmatprep.subr.mxu0 0.0
  %127 = vmatpush1.msra.mxu0 0.0
  %128 = vmatprep.subr.mxu0 0.0
  %129 = vmatpush1.msra.mxu0 0.0
  %130 = vmatprep.subr.mxu0 0.0
  %131 = vmatpush1.msra.mxu0 0.0
  %132 = vmatprep.subr.mxu0 0.0
  %133 = vmatpush1.msra.mxu0 0.0
  %134 = vmatprep.subr.mxu0 0.0
  %135 = vmatpush1.msra.mxu0 0.0
  %136 = vmatprep.subr.mxu0 0.0
  %137 = vmatpush1.msra.mxu0 0.0
  %138 = vmatprep.subr.mxu0 0.0
  %139 = vmatpush1.msra.mxu0 0.0
  %140 = vmatprep.subr.mxu0 0.0
  %141 = vmatpush1.msra.mxu0 0.0
  %142 = vmatprep.subr.mxu0 0.0
  %143 = vmatpush1.msra.mxu0 0.0
  %144 = vmatprep.subr.mxu0 0.0
  %145 = vmatpush1.msra.mxu0 0.0
  %146 = vmatprep.subr.mxu0 0.0
  %147 = vmatpush1.msra.mxu0 0.0
  %148 = vmatprep.subr.mxu0 0.0
  %149 = vmatpush1.msra.mxu0 0.0
  %150 = vmatprep.subr.mxu0 0.0
  %151 = vmatpush1.msra.mxu0 0.0
  %152 = vmatprep.subr.mxu0 0.0
  %153 = vmatpush1.msra.mxu0 0.0
  %154 = vmatprep.subr.mxu0 0.0
  %155 = vmatpush1.msra.mxu0 0.0
  %156 = vmatprep.subr.mxu0 0.0
  %157 = vmatpush1.msra.mxu0 0.0
  %158 = vmatprep.subr.mxu0 0.0
  %159 = vmatpush1.msra.mxu0 0.0
  %160 = vmatprep.mubr.f32.mxu0 0.0
  %161 = vmatmul.mubr.f32.gmra.mrb[0].mxu0 %v94
  %v162 = vpop.f32.mrb[0].mxu0
  %v163 = vadd.f32 %v90, %v162
  %v164 = vpop.f32.mrb[0].mxu0
  %v165 = vadd.f32 %v90, %v164
  %166 = vdwg.mxu0
  %vm167 = vcmp.lt.s32.totalorder %v39, 107
  %vm168 = vcmp.lt.s32.totalorder %v40, 107
  %v169 = vsel %vm167, 1, 0
  %v170 = vsel %vm168, 1, 0
  %vm171 = vcmp.eq.s32.totalorder %v169, 1
  %vm172 = vcmp.eq.s32.totalorder %v170, 1
  %v173 = vsel %vm171, %v163, 0.0
  %v174 = vsel %vm172, %v165, 0.0
  %175 = vrot.lane.b32.xlu0 %v173, 3
  %v176 = vpop.permute.xlu0 %175
  %177 = vrot.lane.b32.xlu0 %v174, 3
  %v178 = vpop.permute.xlu0 %177
  %v179 = vsel %vm47, %v176, %v178
  %v180 = vsel %vm47, %v178, %v176
  %181 = vrot.lane.b32.xlu0 %v173, 2
  %v182 = vpop.permute.xlu0 %181
  %183 = vrot.lane.b32.xlu0 %v174, 2
  %v184 = vpop.permute.xlu0 %183
  %v185 = vsel %vm54, %v182, %v184
  %v186 = vsel %vm54, %v184, %v182
  %187 = vrot.lane.b32.xlu0 %v173, 1
  %v188 = vpop.permute.xlu0 %187
  %189 = vrot.lane.b32.xlu0 %v174, 1
  %v190 = vpop.permute.xlu0 %189
  %v191 = vsel %vm61, %v188, %v190
  %v192 = vsel %vm61, %v190, %v188
  %193 = vrot.lane.b32.xlu0 %v173, 127
  %v194 = vpop.permute.xlu0 %193
  %195 = vrot.lane.b32.xlu0 %v174, 127
  %v196 = vpop.permute.xlu0 %195
  %v197 = vsel %vm68, %v194, %v196
  %v198 = vsel %vm68, %v196, %v194
  %199 = vrot.lane.b32.xlu0 %v173, 126
  %v200 = vpop.permute.xlu0 %199
  %201 = vrot.lane.b32.xlu0 %v174, 126
  %v202 = vpop.permute.xlu0 %201
  %v203 = vsel %vm75, %v200, %v202
  %v204 = vsel %vm75, %v202, %v200
  %205 = vrot.lane.b32.xlu0 %v173, 125
  %v206 = vpop.permute.xlu0 %205
  %207 = vrot.lane.b32.xlu0 %v174, 125
  %v208 = vpop.permute.xlu0 %207
  %v209 = vsel %vm82, %v206, %v208
  %v210 = vsel %vm82, %v208, %v206
  %s211 = scalar_lea.vmem %s1, 16
  %v212 = vld [vmem:[%s211] sm:$0xff]
  %213 = vset.pattern.permute.xlu0 1
  %214 = vperm.xlu0 %213, %v86
  %v215 = vpop.permute.xlu0 %214
  %v218 = vsel %vm92, %v212, 0
  %220 = vmatprep.subr.mxu0 %v179
  %221 = vmatpush1.msra.mxu0 %v180
  %222 = vmatprep.subr.mxu0 %v185
  %223 = vmatpush1.msra.mxu0 %v186
  %224 = vmatprep.subr.mxu0 %v191
  %225 = vmatpush1.msra.mxu0 %v192
  %226 = vmatprep.subr.mxu0 %v174
  %227 = vmatpush1.msra.mxu0 %v173
  %228 = vmatprep.subr.mxu0 %v198
  %229 = vmatpush1.msra.mxu0 %v197
  %230 = vmatprep.subr.mxu0 %v204
  %231 = vmatpush1.msra.mxu0 %v203
  %232 = vmatprep.subr.mxu0 %v210
  %233 = vmatpush1.msra.mxu0 %v209
  %234 = vmatprep.subr.mxu0 0.0
  %235 = vmatpush1.msra.mxu0 0.0
  %236 = vmatprep.subr.mxu0 0.0
  %237 = vmatpush1.msra.mxu0 0.0
  %238 = vmatprep.subr.mxu0 0.0
  %239 = vmatpush1.msra.mxu0 0.0
  %240 = vmatprep.subr.mxu0 0.0
  %241 = vmatpush1.msra.mxu0 0.0
  %242 = vmatprep.subr.mxu0 0.0
  %243 = vmatpush1.msra.mxu0 0.0
  %244 = vmatprep.subr.mxu0 0.0
  %245 = vmatpush1.msra.mxu0 0.0
  %246 = vmatprep.subr.mxu0 0.0
  %247 = vmatpush1.msra.mxu0 0.0
  %248 = vmatprep.subr.mxu0 0.0
  %249 = vmatpush1.msra.mxu0 0.0
  %250 = vmatprep.subr.mxu0 0.0
  %251 = vmatpush1.msra.mxu0 0.0
  %252 = vmatprep.subr.mxu0 0.0
  %253 = vmatpush1.msra.mxu0 0.0
  %254 = vmatprep.subr.mxu0 0.0
  %255 = vmatpush1.msra.mxu0 0.0
  %256 = vmatprep.subr.mxu0 0.0
  %257 = vmatpush1.msra.mxu0 0.0
  %258 = vmatprep.subr.mxu0 0.0
  %259 = vmatpush1.msra.mxu0 0.0
  %260 = vmatprep.subr.mxu0 0.0
  %261 = vmatpush1.msra.mxu0 0.0
  %262 = vmatprep.subr.mxu0 0.0
  %263 = vmatpush1.msra.mxu0 0.0
  %264 = vmatprep.subr.mxu0 0.0
  %265 = vmatpush1.msra.mxu0 0.0
  %266 = vmatprep.subr.mxu0 0.0
  %267 = vmatpush1.msra.mxu0 0.0
  %268 = vmatprep.subr.mxu0 0.0
  %269 = vmatpush1.msra.mxu0 0.0
  %270 = vmatprep.subr.mxu0 0.0
  %271 = vmatpush1.msra.mxu0 0.0
  %272 = vmatprep.subr.mxu0 0.0
  %273 = vmatpush1.msra.mxu0 0.0
  %274 = vmatprep.subr.mxu0 0.0
  %275 = vmatpush1.msra.mxu0 0.0
  %276 = vmatprep.subr.mxu0 0.0
  %277 = vmatpush1.msra.mxu0 0.0
  %278 = vmatprep.subr.mxu0 0.0
  %279 = vmatpush1.msra.mxu0 0.0
  %280 = vmatprep.subr.mxu0 0.0
  %281 = vmatpush1.msra.mxu0 0.0
  %282 = vmatprep.subr.mxu0 0.0
  %283 = vmatpush1.msra.mxu0 0.0
  %284 = vmatprep.mubr.f32.mxu0 0.0
  %285 = vmatmul.mubr.f32.gmra.mrb[0].mxu0 %v218
  %v286 = vpop.f32.mrb[0].mxu0
  %v287 = vadd.f32 %v215, %v286
  %v288 = vpop.f32.mrb[0].mxu0
  %v289 = vadd.f32 %v215, %v288
  %290 = vdwg.mxu0
  %v291 = vsel %vm171, %v287, 0.0
  %v292 = vsel %vm172, %v289, 0.0
  %293 = vrot.lane.b32.xlu0 %v291, 127
  %v294 = vpop.permute.xlu0 %293
  %295 = vrot.lane.b32.xlu0 %v292, 127
  %v296 = vpop.permute.xlu0 %295
  %v297 = vsel %vm68, %v294, %v296
  %v298 = vsel %vm68, %v296, %v294
  %v299 = vmax.f32 %v291, %v297
  %v300 = vmax.f32 %v292, %v298
  %v301 = vmax.f32 %v299, 0.0
  %v302 = vmax.f32 %v300, 0.0
  %vm303 = vcmp.lt.s32.totalorder %v39, 106
  %vm304 = vcmp.lt.s32.totalorder %v40, 106
  %vm305 = vcmp.lt.s32.totalorder %v39, 0
  %v306 = vsub.s32 0, %v39
  %v307 = vsel %vm305, %v306, %v39
  %v308 = vshrl.u32 %v307, 1
  %v309 = vand.u32 %v307, 1
  %v310 = vsub.s32 0, %v309
  %v311 = vsel %vm305, %v310, %v309
  %vm312 = vcmp.lt.s32.totalorder %v40, 0
  %v313 = vsub.s32 0, %v40
  %v314 = vsel %vm312, %v313, %v40
  %v315 = vshrl.u32 %v314, 1
  %v316 = vand.u32 %v314, 1
  %v317 = vsub.s32 0, %v316
  %v318 = vsel %vm312, %v317, %v316
  %vm319 = vcmp.ne.s32.totalorder %v311, 0
  %vm320 = vcmp.ne.s32.totalorder %v318, 0
  %vm321 = vcmp.lt.s32.totalorder %v311, 0
  %vm322 = vcmp.lt.s32.totalorder %v318, 0
  %vm323 = vmand %vm321, %vm319
  %vm324 = vmand %vm322, %vm320
  %v325 = vadd.s32 %v311, 2
  %v326 = vadd.s32 %v318, 2
  %v327 = vsel %vm323, %v325, %v311
  %v328 = vsel %vm324, %v326, %v318
  %vm329 = vcmp.eq.s32.totalorder %v327, 0
  %vm330 = vcmp.eq.s32.totalorder %v328, 0
  %vm331 = vmand %vm303, %vm329
  %vm332 = vmand %vm304, %vm330
  %v333 = vsel %vm331, 1, 0
  %v334 = vsel %vm332, 1, 0
  %vm335 = vcmp.eq.s32.totalorder %v333, 1
  %vm336 = vcmp.eq.s32.totalorder %v334, 1
  %v337 = vsel %vm335, %v301, 0.0
  %v338 = vsel %vm336, %v302, 0.0
  %339 = vrot.lane.b32.xlu0 %v337, 6
  %v340 = vpop.permute.xlu0 %339
  %341 = vrot.lane.b32.xlu0 %v338, 6
  %v342 = vpop.permute.xlu0 %341
  %vm343 = vcmp.lt.s32.totalorder %v15, 6
  %v344 = vsel %vm343, %v340, %v342
  %v345 = vsel %vm343, %v342, %v340
  %346 = vrot.lane.b32.xlu0 %v337, 4
  %v347 = vpop.permute.xlu0 %346
  %348 = vrot.lane.b32.xlu0 %v338, 4
  %v349 = vpop.permute.xlu0 %348
  %vm350 = vcmp.lt.s32.totalorder %v15, 4
  %v351 = vsel %vm350, %v347, %v349
  %v352 = vsel %vm350, %v349, %v347
  %353 = vrot.lane.b32.xlu0 %v337, 2
  %v354 = vpop.permute.xlu0 %353
  %355 = vrot.lane.b32.xlu0 %v338, 2
  %v356 = vpop.permute.xlu0 %355
  %v357 = vsel %vm54, %v354, %v356
  %v358 = vsel %vm54, %v356, %v354
  %359 = vrot.lane.b32.xlu0 %v337, 126
  %v360 = vpop.permute.xlu0 %359
  %361 = vrot.lane.b32.xlu0 %v338, 126
  %v362 = vpop.permute.xlu0 %361
  %v363 = vsel %vm75, %v360, %v362
  %v364 = vsel %vm75, %v362, %v360
  %365 = vrot.lane.b32.xlu0 %v337, 124
  %v366 = vpop.permute.xlu0 %365
  %367 = vrot.lane.b32.xlu0 %v338, 124
  %v368 = vpop.permute.xlu0 %367
  %vm369 = vcmp.lt.s32.totalorder %v15, 124
  %v370 = vsel %vm369, %v366, %v368
  %v371 = vsel %vm369, %v368, %v366
  %372 = vrot.lane.b32.xlu0 %v337, 122
  %v373 = vpop.permute.xlu0 %372
  %374 = vrot.lane.b32.xlu0 %v338, 122
  %v375 = vpop.permute.xlu0 %374
  %vm376 = vcmp.lt.s32.totalorder %v15, 122
  %v377 = vsel %vm376, %v373, %v375
  %v378 = vsel %vm376, %v375, %v373
  %s379 = scalar_lea.vmem %s1, 32
  %v380 = vld [vmem:[%s379] sm:$0xff]
  %v381 = vld [vmem:[%s379 + $0x8] sm:$0xff]
  %v382 = vld [vmem:[%s2] sm:$0xff]
  %v383 = vld [vmem:[%s2 + $0x8] sm:$0xff]
  %385 = vset.pattern.permute.xlu0 2
  %386 = vperm.xlu0 %385, %v382
  %v387 = vpop.permute.xlu0 %386
  %390 = vset.pattern.permute.xlu0 2
  %391 = vperm.xlu0 %390, %v383
  %v392 = vpop.permute.xlu0 %391
  %v395 = vsel %vm92, %v380, 0
  %v398 = vsel %vm92, %v381, 0
  %400 = vmatprep.subr.mxu0 %v344
  %401 = vmatpush1.msra.mxu0 %v345
  %402 = vmatprep.subr.mxu0 %v351
  %403 = vmatpush1.msra.mxu0 %v352
  %404 = vmatprep.subr.mxu0 %v357
  %405 = vmatpush1.msra.mxu0 %v358
  %406 = vmatprep.subr.mxu0 %v338
  %407 = vmatpush1.msra.mxu0 %v337
  %408 = vmatprep.subr.mxu0 %v364
  %409 = vmatpush1.msra.mxu0 %v363
  %410 = vmatprep.subr.mxu0 %v371
  %411 = vmatpush1.msra.mxu0 %v370
  %412 = vmatprep.subr.mxu0 %v378
  %413 = vmatpush1.msra.mxu0 %v377
  %414 = vmatprep.subr.mxu0 0.0
  %415 = vmatpush1.msra.mxu0 0.0
  %416 = vmatprep.subr.mxu0 0.0
  %417 = vmatpush1.msra.mxu0 0.0
  %418 = vmatprep.subr.mxu0 0.0
  %419 = vmatpush1.msra.mxu0 0.0
  %420 = vmatprep.subr.mxu0 0.0
  %421 = vmatpush1.msra.mxu0 0.0
  %422 = vmatprep.subr.mxu0 0.0
  %423 = vmatpush1.msra.mxu0 0.0
  %424 = vmatprep.subr.mxu0 0.0
  %425 = vmatpush1.msra.mxu0 0.0
  %426 = vmatprep.subr.mxu0 0.0
  %427 = vmatpush1.msra.mxu0 0.0
  %428 = vmatprep.subr.mxu0 0.0
  %429 = vmatpush1.msra.mxu0 0.0
  %430 = vmatprep.subr.mxu0 0.0
  %431 = vmatpush1.msra.mxu0 0.0
  %432 = vmatprep.subr.mxu0 0.0
  %433 = vmatpush1.msra.mxu0 0.0
  %434 = vmatprep.subr.mxu0 0.0
  %435 = vmatpush1.msra.mxu0 0.0
  %436 = vmatprep.subr.mxu0 0.0
  %437 = vmatpush1.msra.mxu0 0.0
  %438 = vmatprep.subr.mxu0 0.0
  %439 = vmatpush1.msra.mxu0 0.0
  %440 = vmatprep.subr.mxu0 0.0
  %441 = vmatpush1.msra.mxu0 0.0
  %442 = vmatprep.subr.mxu0 0.0
  %443 = vmatpush1.msra.mxu0 0.0
  %444 = vmatprep.subr.mxu0 0.0
  %445 = vmatpush1.msra.mxu0 0.0
  %446 = vmatprep.subr.mxu0 0.0
  %447 = vmatpush1.msra.mxu0 0.0
  %448 = vmatprep.subr.mxu0 0.0
  %449 = vmatpush1.msra.mxu0 0.0
  %450 = vmatprep.subr.mxu0 0.0
  %451 = vmatpush1.msra.mxu0 0.0
  %452 = vmatprep.subr.mxu0 0.0
  %453 = vmatpush1.msra.mxu0 0.0
  %454 = vmatprep.subr.mxu0 0.0
  %455 = vmatpush1.msra.mxu0 0.0
  %456 = vmatprep.subr.mxu0 0.0
  %457 = vmatpush1.msra.mxu0 0.0
  %458 = vmatprep.subr.mxu0 0.0
  %459 = vmatpush1.msra.mxu0 0.0
  %460 = vmatprep.subr.mxu0 0.0
  %461 = vmatpush1.msra.mxu0 0.0
  %462 = vmatprep.subr.mxu0 0.0
  %463 = vmatpush1.msra.mxu0 0.0
  %464 = vmatprep.mubr.f32.mxu0 0.0
  %465 = vmatmul.mubr.f32.gmra.mrb[0].mxu0 %v395
  %v466 = vpop.f32.mrb[0].mxu0
  %v467 = vadd.f32 %v387, %v466
  %v468 = vpop.f32.mrb[0].mxu0
  %v469 = vadd.f32 %v387, %v468
  %470 = vmatprep.mubr.f32.mxu0 0.0
  %471 = vmatmul.mubr.f32.gmra.mrb[0].mxu0 %v398
  %v472 = vpop.f32.mrb[0].mxu0
  %v473 = vadd.f32 %v392, %v472
  %v474 = vpop.f32.mrb[0].mxu0
  %v475 = vadd.f32 %v392, %v474
  %476 = vdwg.mxu0
  %v477 = vsel %vm335, %v467, 0.0
  %v478 = vsel %vm336, %v469, 0.0
  %v479 = vsel %vm335, %v473, 0.0
  %v480 = vsel %vm336, %v475, 0.0
  %481 = vrot.lane.b32.xlu0 %v477, 6
  %v482 = vpop.permute.xlu0 %481
  %483 = vrot.lane.b32.xlu0 %v479, 6
  %v484 = vpop.permute.xlu0 %483
  %485 = vrot.lane.b32.xlu0 %v478, 6
  %v486 = vpop.permute.xlu0 %485
  %487 = vrot.lane.b32.xlu0 %v480, 6
  %v488 = vpop.permute.xlu0 %487
  %v489 = vsel %vm343, %v482, %v486
  %v490 = vsel %vm343, %v484, %v488
  %v491 = vsel %vm343, %v486, %v482
  %v492 = vsel %vm343, %v488, %v484
  %493 = vrot.lane.b32.xlu0 %v477, 4
  %v494 = vpop.permute.xlu0 %493
  %495 = vrot.lane.b32.xlu0 %v479, 4
  %v496 = vpop.permute.xlu0 %495
  %497 = vrot.lane.b32.xlu0 %v478, 4
  %v498 = vpop.permute.xlu0 %497
  %499 = vrot.lane.b32.xlu0 %v480, 4
  %v500 = vpop.permute.xlu0 %499
  %v501 = vsel %vm350, %v494, %v498
  %v502 = vsel %vm350, %v496, %v500
  %v503 = vsel %vm350, %v498, %v494
  %v504 = vsel %vm350, %v500, %v496
  %505 = vrot.lane.b32.xlu0 %v477, 2
  %v506 = vpop.permute.xlu0 %505
  %507 = vrot.lane.b32.xlu0 %v479, 2
  %v508 = vpop.permute.xlu0 %507
  %509 = vrot.lane.b32.xlu0 %v478, 2
  %v510 = vpop.permute.xlu0 %509
  %511 = vrot.lane.b32.xlu0 %v480, 2
  %v512 = vpop.permute.xlu0 %511
  %v513 = vsel %vm54, %v506, %v510
  %v514 = vsel %vm54, %v508, %v512
  %v515 = vsel %vm54, %v510, %v506
  %v516 = vsel %vm54, %v512, %v508
  %s517 = scalar_lea.vmem %s1, 48
  %v518 = vld [vmem:[%s517] sm:$0xff]
  %v519 = vld [vmem:[%s517 + $0x8] sm:$0xff]
  %520 = vrot.lane.b32.xlu0 %v477, 126
  %v521 = vpop.permute.xlu0 %520
  %522 = vrot.lane.b32.xlu0 %v479, 126
  %v523 = vpop.permute.xlu0 %522
  %524 = vrot.lane.b32.xlu0 %v478, 126
  %v525 = vpop.permute.xlu0 %524
  %526 = vrot.lane.b32.xlu0 %v480, 126
  %v527 = vpop.permute.xlu0 %526
  %v528 = vsel %vm75, %v521, %v525
  %v529 = vsel %vm75, %v523, %v527
  %v530 = vsel %vm75, %v525, %v521
  %v531 = vsel %vm75, %v527, %v523
  %532 = vrot.lane.b32.xlu0 %v477, 124
  %v533 = vpop.permute.xlu0 %532
  %534 = vrot.lane.b32.xlu0 %v479, 124
  %v535 = vpop.permute.xlu0 %534
  %536 = vrot.lane.b32.xlu0 %v478, 124
  %v537 = vpop.permute.xlu0 %536
  %538 = vrot.lane.b32.xlu0 %v480, 124
  %v539 = vpop.permute.xlu0 %538
  %v540 = vsel %vm369, %v533, %v537
  %v541 = vsel %vm369, %v535, %v539
  %v542 = vsel %vm369, %v537, %v533
  %v543 = vsel %vm369, %v539, %v535
  %544 = vrot.lane.b32.xlu0 %v477, 122
  %v545 = vpop.permute.xlu0 %544
  %546 = vrot.lane.b32.xlu0 %v479, 122
  %v547 = vpop.permute.xlu0 %546
  %548 = vrot.lane.b32.xlu0 %v478, 122
  %v549 = vpop.permute.xlu0 %548
  %550 = vrot.lane.b32.xlu0 %v480, 122
  %v551 = vpop.permute.xlu0 %550
  %v552 = vsel %vm376, %v545, %v549
  %v553 = vsel %vm376, %v547, %v551
  %v554 = vsel %vm376, %v549, %v545
  %v555 = vsel %vm376, %v551, %v547
  %558 = vrot.lane.b32.xlu0 %v518, 64
  %v559 = vpop.permute.xlu0 %558
  %560 = vrot.lane.b32.xlu0 %v519, 64
  %v561 = vpop.permute.xlu0 %560
  %vm562 = vcmask 392192
  %v563 = vsel %vm562, %v559, 0
  %v565 = vsel %vm562, %v561, 0
  %567 = vmatprep.subr.mxu0 %v530
  %568 = vmatpush1.msra.mxu0 %v528
  %569 = vmatprep.subr.mxu0 %v531
  %570 = vmatpush1.msra.mxu0 %v529
  %571 = vmatprep.subr.mxu0 %v542
  %572 = vmatpush1.msra.mxu0 %v540
  %573 = vmatprep.subr.mxu0 %v543
  %574 = vmatpush1.msra.mxu0 %v541
  %575 = vmatprep.subr.mxu0 %v554
  %576 = vmatpush1.msra.mxu0 %v552
  %577 = vmatprep.subr.mxu0 %v555
  %578 = vmatpush1.msra.mxu0 %v553
  %579 = vmatprep.subr.mxu0 0.0
  %580 = vmatpush1.msra.mxu0 0.0
  %581 = vmatprep.subr.mxu0 0.0
  %582 = vmatpush1.msra.mxu0 0.0
  %583 = vmatprep.subr.mxu0 0.0
  %584 = vmatpush1.msra.mxu0 0.0
  %585 = vmatprep.subr.mxu0 0.0
  %586 = vmatpush1.msra.mxu0 0.0
  %587 = vmatprep.subr.mxu0 0.0
  %588 = vmatpush1.msra.mxu0 0.0
  %589 = vmatprep.subr.mxu0 0.0
  %590 = vmatpush1.msra.mxu0 0.0
  %591 = vmatprep.subr.mxu0 0.0
  %592 = vmatpush1.msra.mxu0 0.0
  %593 = vmatprep.subr.mxu0 0.0
  %594 = vmatpush1.msra.mxu0 0.0
  %595 = vmatprep.subr.mxu0 0.0
  %596 = vmatpush1.msra.mxu0 0.0
  %597 = vmatprep.subr.mxu0 0.0
  %598 = vmatpush1.msra.mxu0 0.0
  %599 = vmatprep.subr.mxu0 0.0
  %600 = vmatpush1.msra.mxu0 0.0
  %601 = vmatprep.subr.mxu0 0.0
  %602 = vmatpush1.msra.mxu0 0.0
  %603 = vmatprep.subr.mxu0 0.0
  %604 = vmatpush1.msra.mxu0 0.0
  %605 = vmatprep.subr.mxu0 0.0
  %606 = vmatpush1.msra.mxu0 0.0
  %607 = vmatprep.subr.mxu0 0.0
  %608 = vmatpush1.msra.mxu0 0.0
  %609 = vmatprep.subr.mxu0 0.0
  %610 = vmatpush1.msra.mxu0 0.0
  %611 = vmatprep.subr.mxu0 0.0
  %612 = vmatpush1.msra.mxu0 0.0
  %613 = vmatprep.subr.mxu0 0.0
  %614 = vmatpush1.msra.mxu0 0.0
  %615 = vmatprep.subr.mxu0 0.0
  %616 = vmatpush1.msra.mxu0 0.0
  %617 = vmatprep.subr.mxu0 0.0
  %618 = vmatpush1.msra.mxu0 0.0
  %619 = vmatprep.subr.mxu0 0.0
  %620 = vmatpush1.msra.mxu0 0.0
  %621 = vmatprep.subr.mxu0 0.0
  %622 = vmatpush1.msra.mxu0 0.0
  %623 = vmatprep.subr.mxu0 0.0
  %624 = vmatpush1.msra.mxu0 0.0
  %625 = vmatprep.subr.mxu0 0.0
  %626 = vmatpush1.msra.mxu0 0.0
  %627 = vmatprep.subr.mxu0 0.0
  %628 = vmatpush1.msra.mxu0 0.0
  %629 = vmatprep.subr.mxu0 0.0
  %630 = vmatpush1.msra.mxu0 0.0
  %631 = vmatprep.mubr.f32.mxu0 0.0
  %632 = vmatmul.mubr.f32.gmra.mrb[0].mxu0 %v563
  %v633 = vpop.f32.mrb[0].mxu0
  %v634 = vadd.f32 0.0, %v633
  %v635 = vpop.f32.mrb[0].mxu0
  %v636 = vadd.f32 0.0, %v635
  %637 = vmatprep.mubr.f32.mxu0 0.0
  %638 = vmatmul.mubr.f32.gmra.mrb[0].mxu0 %v565
  %v639 = vpop.f32.mrb[0].mxu0
  %v640 = vadd.f32 0.0, %v639
  %v641 = vpop.f32.mrb[0].mxu0
  %v642 = vadd.f32 0.0, %v641
  %643 = vdwg.mxu0
  %vm644 = vcmask 523264
  %v645 = vsel %vm644, %v518, 0
  %v647 = vsel %vm644, %v519, 0
  %649 = vmatprep.subr.mxu0 %v489
  %650 = vmatpush1.msra.mxu0 %v491
  %651 = vmatprep.subr.mxu0 %v490
  %652 = vmatpush1.msra.mxu0 %v492
  %653 = vmatprep.subr.mxu0 %v501
  %654 = vmatpush1.msra.mxu0 %v503
  %655 = vmatprep.subr.mxu0 %v502
  %656 = vmatpush1.msra.mxu0 %v504
  %657 = vmatprep.subr.mxu0 %v513
  %658 = vmatpush1.msra.mxu0 %v515
  %659 = vmatprep.subr.mxu0 %v514
  %660 = vmatpush1.msra.mxu0 %v516
  %661 = vmatprep.subr.mxu0 %v478
  %662 = vmatpush1.msra.mxu0 %v477
  %663 = vmatprep.subr.mxu0 %v480
  %664 = vmatpush1.msra.mxu0 %v479
  %665 = vmatprep.subr.mxu0 0.0
  %666 = vmatpush1.msra.mxu0 0.0
  %667 = vmatprep.subr.mxu0 0.0
  %668 = vmatpush1.msra.mxu0 0.0
  %669 = vmatprep.subr.mxu0 0.0
  %670 = vmatpush1.msra.mxu0 0.0
  %671 = vmatprep.subr.mxu0 0.0
  %672 = vmatpush1.msra.mxu0 0.0
  %673 = vmatprep.subr.mxu0 0.0
  %674 = vmatpush1.msra.mxu0 0.0
  %675 = vmatprep.subr.mxu0 0.0
  %676 = vmatpush1.msra.mxu0 0.0
  %677 = vmatprep.subr.mxu0 0.0
  %678 = vmatpush1.msra.mxu0 0.0
  %679 = vmatprep.subr.mxu0 0.0
  %680 = vmatpush1.msra.mxu0 0.0
  %681 = vmatprep.subr.mxu0 0.0
  %682 = vmatpush1.msra.mxu0 0.0
  %683 = vmatprep.subr.mxu0 0.0
  %684 = vmatpush1.msra.mxu0 0.0
  %685 = vmatprep.subr.mxu0 0.0
  %686 = vmatpush1.msra.mxu0 0.0
  %687 = vmatprep.subr.mxu0 0.0
  %688 = vmatpush1.msra.mxu0 0.0
  %689 = vmatprep.subr.mxu0 0.0
  %690 = vmatpush1.msra.mxu0 0.0
  %691 = vmatprep.subr.mxu0 0.0
  %692 = vmatpush1.msra.mxu0 0.0
  %693 = vmatprep.subr.mxu0 0.0
  %694 = vmatpush1.msra.mxu0 0.0
  %695 = vmatprep.subr.mxu0 0.0
  %696 = vmatpush1.msra.mxu0 0.0
  %697 = vmatprep.subr.mxu0 0.0
  %698 = vmatpush1.msra.mxu0 0.0
  %699 = vmatprep.subr.mxu0 0.0
  %700 = vmatpush1.msra.mxu0 0.0
  %701 = vmatprep.subr.mxu0 0.0
  %702 = vmatpush1.msra.mxu0 0.0
  %703 = vmatprep.subr.mxu0 0.0
  %704 = vmatpush1.msra.mxu0 0.0
  %705 = vmatprep.subr.mxu0 0.0
  %706 = vmatpush1.msra.mxu0 0.0
  %707 = vmatprep.subr.mxu0 0.0
  %708 = vmatpush1.msra.mxu0 0.0
  %709 = vmatprep.subr.mxu0 0.0
  %710 = vmatpush1.msra.mxu0 0.0
  %711 = vmatprep.subr.mxu0 0.0
  %712 = vmatpush1.msra.mxu0 0.0
  %713 = vmatprep.mubr.f32.mxu0 0.0
  %714 = vmatmul.mubr.f32.gmra.mrb[0].mxu0 %v645
  %v715 = vpop.f32.mrb[0].mxu0
  %v716 = vadd.f32 %v634, %v715
  %v717 = vpop.f32.mrb[0].mxu0
  %v718 = vadd.f32 %v636, %v717
  %719 = vmatprep.mubr.f32.mxu0 0.0
  %720 = vmatmul.mubr.f32.gmra.mrb[0].mxu0 %v647
  %v721 = vpop.f32.mrb[0].mxu0
  %v722 = vadd.f32 %v640, %v721
  %v723 = vpop.f32.mrb[0].mxu0
  %v724 = vadd.f32 %v642, %v723
  %725 = vdwg.mxu0
  %726 = vset.pattern.permute.xlu0 3
  %727 = vperm.xlu0 %726, %v382
  %v728 = vpop.permute.xlu0 %727
  %730 = vset.pattern.permute.xlu0 3
  %731 = vperm.xlu0 %730, %v383
  %v732 = vpop.permute.xlu0 %731
  %v734 = vadd.f32 %v716, %v728
  %v735 = vadd.f32 %v718, %v728
  %v736 = vadd.f32 %v722, %v732
  %v737 = vadd.f32 %v724, %v732
  %v738 = vsel %vm335, %v734, 0.0
  %v739 = vsel %vm336, %v735, 0.0
  %v740 = vsel %vm335, %v736, 0.0
  %v741 = vsel %vm336, %v737, 0.0
  %742 = vrot.lane.b32.xlu0 %v738, 126
  %v743 = vpop.permute.xlu0 %742
  %744 = vrot.lane.b32.xlu0 %v740, 126
  %v745 = vpop.permute.xlu0 %744
  %746 = vrot.lane.b32.xlu0 %v739, 126
  %v747 = vpop.permute.xlu0 %746
  %748 = vrot.lane.b32.xlu0 %v741, 126
  %v749 = vpop.permute.xlu0 %748
  %v750 = vsel %vm75, %v743, %v747
  %v751 = vsel %vm75, %v745, %v749
  %v752 = vsel %vm75, %v747, %v743
  %v753 = vsel %vm75, %v749, %v745
  %v754 = vmax.f32 %v738, %v750
  %v755 = vmax.f32 %v739, %v752
  %v756 = vmax.f32 %v740, %v751
  %v757 = vmax.f32 %v741, %v753
  %v758 = vmax.f32 %v754, 0.0
  %v759 = vmax.f32 %v755, 0.0
  %v760 = vmax.f32 %v756, 0.0
  %v761 = vmax.f32 %v757, 0.0
  %762 = vst [vmem:[%s3] sm:$0xff] %v758
  %763 = vst [vmem:[%s3 + $0x8] sm:$0xff] %v759
  %764 = vst [vmem:[%s3 + $0x10] sm:$0xff] %v760
  %765 = vst [vmem:[%s3 + $0x18] sm:$0xff] %v761
  // Predicated region
  $region14: #{encoder_forward_pallas.1} parent=0 // pred_check
    _
  $region15: #{encoder_forward_pallas.1} parent=0 // pred_check_branch
    %767 = sbr.rel (0) target = $region17
  $region16: #{encoder_forward_pallas.1} parent=0 // pred_region
    _
  $region17: #{encoder_forward_pallas.1} parent=0 // pred_fallthru
    _
  // Predicated region
  $region18: #{encoder_forward_pallas.1} parent=0 // pred_check
    _
  $region19: #{encoder_forward_pallas.1} parent=0 // pred_check_branch
    %769 = sbr.rel (0) target = $region21
  $region20: #{encoder_forward_pallas.1} parent=0 // pred_region
    _
  $region21: #{encoder_forward_pallas.1} parent=0 // pred_fallthru
    _

</llo_original>
